<compile_context>
chip_gen: v6e
topology: v6e:2x2x1
jax: 0.10.0
libtpu: 0.0.40
codegen_flags: <defaults>
</compile_context>

<pallas_src>
import jax
import jax.numpy as jnp
from jax.experimental import pallas as pl
from jax.experimental.pallas import tpu as pltpu


def se_scale_mul_kernel(v_ref, w_ref, b_ref, x_ref, o_ref):
    # v_ref: (1, 1, Cin)       squeezed x186 for this batch element
    # w_ref: (tile_c, Cin)     slice of the 1x1 conv weight
    # b_ref: (tile_c, 1)       slice of the conv bias
    # x_ref: (1, tile_c, HW)   slice of x183 (NCHW, H*W flattened on lanes)
    # o_ref: (1, tile_c, HW)
    v = v_ref[0]                                                        # (1, Cin)
    s = jnp.sum(w_ref[...] * v, axis=1, keepdims=True) + b_ref[...]     # (tile_c, 1)
    scale = jax.nn.sigmoid(s)                                           # per-channel SE scale
    o_ref[...] = (x_ref[...] * scale).astype(o_ref.dtype)               # lane-broadcast multiply


def _pick_channel_tile(cout, target=128):
    # Largest divisor of cout that is <= target and a multiple of 8 (sublane
    # aligned).  Falls back to the full extent, which is always a legal block.
    for d in range(min(target, cout), 0, -1):
        if cout % d == 0 and d % 8 == 0:
            return d
    return cout


def se_conv_sigmoid_mul(x186, x183, weight, bias, *, channel_tile=128):
    """x186: (N, Cin, 1, 1); x183: (N, Cout, H, W);
    weight: (Cout, Cin, 1, 1); bias: (Cout,)."""
    N, Cin, _, _ = x186.shape
    Nx, Cout, H, W = x183.shape
    assert N == Nx, "batch of x186 and x183 must match"
    HW = H * W

    v = x186.reshape(N, 1, Cin).astype(jnp.float32)       # (N, 1, Cin)
    w = weight.reshape(Cout, Cin).astype(jnp.float32)     # (Cout, Cin)
    b = bias.reshape(Cout, 1).astype(jnp.float32)         # (Cout, 1)
    x = x183.reshape(N, Cout, HW)                         # pure view, no HBM traffic

    tile_c = _pick_channel_tile(Cout, channel_tile)
    grid = (N, Cout // tile_c)

    out_flat = pl.pallas_call(
        se_scale_mul_kernel,
        out_shape=jax.ShapeDtypeStruct((N, Cout, HW), x183.dtype),
        grid_spec=pltpu.PrefetchScalarGridSpec(
            num_scalar_prefetch=0,
            grid=grid,
            in_specs=[
                pl.BlockSpec((1, 1, Cin), lambda n, c: (n, 0, 0)),
                pl.BlockSpec((tile_c, Cin), lambda n, c: (c, 0)),
                pl.BlockSpec((tile_c, 1), lambda n, c: (c, 0)),
                pl.BlockSpec((1, tile_c, HW), lambda n, c: (n, c, 0)),
            ],
            out_specs=pl.BlockSpec((1, tile_c, HW), lambda n, c: (n, c, 0)),
        ),
        compiler_params=pltpu.CompilerParams(
            dimension_semantics=("parallel", "parallel")),
    )(v, w, b, x)

    return out_flat.reshape(N, Cout, H, W)


if __name__ == "__main__":
    # Actual module shapes (already small: x183 is ~1.5 MB f32).
    N, Cin, Cout, H, W = 1, 20, 480, 28, 28

    key = jax.random.PRNGKey(0)
    k1, k2, k3, k4 = jax.random.split(key, 4)
    x186 = jax.random.normal(k1, (N, Cin, 1, 1), dtype=jnp.float32)
    x183 = jax.random.normal(k2, (N, Cout, H, W), dtype=jnp.float32)
    weight = jax.random.normal(k3, (Cout, Cin, 1, 1), dtype=jnp.float32) * 0.1
    bias = jax.random.normal(k4, (Cout,), dtype=jnp.float32) * 0.1

    out = se_conv_sigmoid_mul(x186, x183, weight, bias)
    out = jax.block_until_ready(out)

    # Pure-JAX reference (1x1 conv on 1x1 spatial == per-channel matvec + bias),
    # computed with an explicit f32 mul+sum so precision matches the kernel.
    w2d = weight.reshape(Cout, Cin)
    v1d = x186.reshape(1, Cin)
    scale_ref = jax.nn.sigmoid(jnp.sum(w2d * v1d, axis=1) + bias)      # (Cout,)
    ref = scale_ref.reshape(1, Cout, 1, 1) * x183

    assert out.shape == (N, Cout, H, W)
    assert jnp.allclose(out, ref, atol=1e-5, rtol=1e-5)

    print("KERNEL_OK")
</pallas_src>

<mosaic_0001>
module attributes {stable_mosaic.version = 11 : i64} {
  func.func @se_scale_mul_kernel(%arg0: i32, %arg1: i32, %arg2: memref<1x1x20xf32, #tpu.memory_space<vmem>>, %arg3: memref<120x20xf32, #tpu.memory_space<vmem>>, %arg4: memref<120x1xf32, #tpu.memory_space<vmem>>, %arg5: memref<1x120x784xf32, #tpu.memory_space<vmem>>, %arg6: memref<1x120x784xf32, #tpu.memory_space<vmem>>) attributes {dimension_semantics = [#tpu.dimension_semantics<parallel>, #tpu.dimension_semantics<parallel>], iteration_bounds = array<i64: 1, 4>, scalar_prefetch = 0 : i64, scratch_operands = 0 : i64, tpu.core_type = #tpu.core_type<tc>, window_params = [{transform_indices = @transform_0, window_bounds = array<i64: 1, 1, 20>}, {transform_indices = @transform_1, window_bounds = array<i64: 120, 20>}, {transform_indices = @transform_2, window_bounds = array<i64: 120, 1>}, {transform_indices = @transform_3, window_bounds = array<i64: 1, 120, 784>}, {transform_indices = @transform_4, window_bounds = array<i64: 1, 120, 784>}]} {
    %c0 = arith.constant 0 : index
    %c0_0 = arith.constant 0 : index
    %c0_1 = arith.constant 0 : index
    %0 = vector.load %arg2[%c0, %c0_0, %c0_1] : memref<1x1x20xf32, #tpu.memory_space<vmem>>, vector<1x1x20xf32>
    %1 = vector.shape_cast %0 : vector<1x1x20xf32> to vector<1x20xf32>
    %c0_2 = arith.constant 0 : index
    %c0_3 = arith.constant 0 : index
    %2 = vector.load %arg3[%c0_2, %c0_3] : memref<120x20xf32, #tpu.memory_space<vmem>>, vector<120x20xf32>
    %3 = vector.broadcast %1 : vector<1x20xf32> to vector<120x20xf32>
    %4 = arith.mulf %2, %3 : vector<120x20xf32>
    %cst = arith.constant dense<0.000000e+00> : vector<120xf32>
    %5 = vector.multi_reduction <add>, %4, %cst [1] : vector<120x20xf32> to vector<120xf32>
    %6 = vector.shape_cast %5 : vector<120xf32> to vector<120x1xf32>
    %c0_4 = arith.constant 0 : index
    %c0_5 = arith.constant 0 : index
    %7 = vector.load %arg4[%c0_4, %c0_5] : memref<120x1xf32, #tpu.memory_space<vmem>>, vector<120x1xf32>
    %8 = arith.addf %6, %7 : vector<120x1xf32>
    %9 = arith.negf %8 : vector<120x1xf32>
    %10 = math.exp %9 : vector<120x1xf32>
    %cst_6 = arith.constant 1.000000e+00 : f32
    %11 = vector.broadcast %cst_6 : f32 to vector<120x1xf32>
    %12 = arith.addf %11, %10 : vector<120x1xf32>
    %13 = arith.divf %11, %12 : vector<120x1xf32>
    %c0_7 = arith.constant 0 : index
    %c0_8 = arith.constant 0 : index
    %c0_9 = arith.constant 0 : index
    %14 = vector.load %arg5[%c0_7, %c0_8, %c0_9] : memref<1x120x784xf32, #tpu.memory_space<vmem>>, vector<1x120x784xf32>
    %15 = vector.shape_cast %13 : vector<120x1xf32> to vector<1x120x1xf32>
    %16 = vector.broadcast %15 : vector<1x120x1xf32> to vector<1x120x784xf32>
    %17 = arith.mulf %14, %16 : vector<1x120x784xf32>
    %c0_10 = arith.constant 0 : index
    %c0_11 = arith.constant 0 : index
    %c0_12 = arith.constant 0 : index
    %18 = vector.load %arg6[%c0_10, %c0_11, %c0_12] : memref<1x120x784xf32, #tpu.memory_space<vmem>>, vector<1x120x784xf32>
    tpu.vector_store %arg6[%c0_10, %c0_11, %c0_12], %17 {strides = array<i32>} : memref<1x120x784xf32, #tpu.memory_space<vmem>>, vector<1x120x784xf32>,
    return
  }
  func.func @transform_0(%arg0: i32, %arg1: i32) -> (i32, i32, i32) {
    %c0_i32 = arith.constant 0 : i32
    %c0_i32_0 = arith.constant 0 : i32
    %c0_i32_1 = arith.constant 0 : i32
    return %arg0, %c0_i32, %c0_i32_0 : i32, i32, i32
  }
  func.func @transform_1(%arg0: i32, %arg1: i32) -> (i32, i32) {
    %c0_i32 = arith.constant 0 : i32
    %c0_i32_0 = arith.constant 0 : i32
    return %arg1, %c0_i32 : i32, i32
  }
  func.func @transform_2(%arg0: i32, %arg1: i32) -> (i32, i32) {
    %c0_i32 = arith.constant 0 : i32
    %c0_i32_0 = arith.constant 0 : i32
    return %arg1, %c0_i32 : i32, i32
  }
  func.func @transform_3(%arg0: i32, %arg1: i32) -> (i32, i32, i32) {
    %c0_i32 = arith.constant 0 : i32
    %c0_i32_0 = arith.constant 0 : i32
    return %arg0, %arg1, %c0_i32 : i32, i32, i32
  }
  func.func @transform_4(%arg0: i32, %arg1: i32) -> (i32, i32, i32) {
    %c0_i32 = arith.constant 0 : i32
    %c0_i32_0 = arith.constant 0 : i32
    return %arg0, %arg1, %c0_i32 : i32, i32, i32
  }
}

</mosaic_0001>

<llo_original>
// kernel: tpu_custom_call.1
$region0: #{tpu_custom_call.1}
  #allocation0 [shape = 'u32[]', space=smem, size = 0x4, offset = 0x4, fixed_abs, tag = 'smem constant byte address 0x4 - core index']
  #allocation1 [shape = 'u32[144,128]{1,0:T(1,128)}', space=vmem, size = 0x12000, scoped, tag = 'internal scratch']
  %s0 = inlined_call_operand.vmem [shape: f32[1,1,20], index: 0, kind: input, shape index: {}]
  %s1 = inlined_call_operand.vmem [shape: f32[480,20], index: 1, kind: input, shape index: {}]
  %s2 = inlined_call_operand.vmem [shape: f32[480,1], index: 2, kind: input, shape index: {}]
  %s3 = inlined_call_operand.vmem [shape: f32[1,480,784], index: 3, kind: input, shape index: {}]
  %s4 = inlined_call_operand.vmem [shape: f32[1,480,784], index: 4, kind: output, shape index: {}]
  %s5 = sld [smem:[#allocation0]]
  $region49: #{tpu_custom_call.1} parent=0
    _
  %s7 = ssub.s32 1, %s5
  %s8 = scalar_select 0, %s7, %s5
  loop: start=0, step=1, limit=6
  $region2: #{tpu_custom_call.1} parent=0 // loop_pre_header
    _
  $region3: #{tpu_custom_call.1} parent=0 // loop_header
    %s10 = sphi 0, %s14
    %p11 = scmp.ge.s32.totalorder %s10, 6
    %s17 = sphi 0, %s29
    %s18 = sphi 0, %s25
    %s19 = sphi 0, %s17
    %s20 = sphi 0, %s18
    %s21 = sphi 0, %s19
    %s22 = sphi 0, %s20
    %s32 = sphi 0, %s34
    %s35 = sphi 0, %s32
    %s36 = sphi 0, %s35
    %s52 = sphi 0, %s36
    %s58 = sphi 0, %s60
    %s61 = sphi 0, %s58
    %s62 = sphi 0, %s61
    %s78 = sphi 0, %s62
    %s84 = sphi 0, %s86
    %s87 = sphi 0, %s84
    %s88 = sphi 0, %s87
    %s104 = sphi 0, %s88
    %s112 = sphi 0, %s114
    %s115 = sphi 0, %s112
    %s116 = sphi 0, %s115
    %s132 = sphi 0, %s116
    %s140 = sphi 0, %s142
    %s143 = sphi 0, %s140
    %s144 = sphi 0, %s143
    %s160 = sphi 0, %s144
  $region4: #{tpu_custom_call.1} parent=0 // loop_header_branch
    %13 = sbr.rel (%p11) target = $region8
  $region5: #{tpu_custom_call.1} parent=0 // loop_body
    %s15 = ssub.s32 %s10, 1
    %s16 = ssub.s32 %s10, 2
    %s23 = sadd.s32 1, %s18
    %p24 = scmp.ge.s32.totalorder %s23, 4
    %s25 = scalar_select %p24, 0, %s23
    %s26 = sadd.s32 1, %s17
    %s27 = scalar_select %p24, %s26, %s17
    %p28 = scmp.ge.s32.totalorder %s27, 1
    %s29 = scalar_select %p28, 0, %s27
    %s30 = ssub.s32 %s17, %s29
    %p31 = scmp.eq.s32.totalorder %s30, 0
    %s33 = sadd.s32 %s32, 1
    %s34 = scalar_select %p31, %s32, %s33
    %p37 = pneg %p31
    %p38 = scmp.eq.s32.totalorder %s10, 3
    %p39 = por %p37, %p38
    %p40 = scmp.ne.s32.totalorder %s32, %s35
    %p41 = scmp.eq.s32.totalorder %s10, 0
    %p42 = por %p40, %p41
    %p43 = scmp.ne.s32.totalorder %s32, %s35
    %p44 = scmp.eq.s32.totalorder %s15, 3
    %p45 = por %p43, %p44
    %p46 = scmp.ne.s32.totalorder %s35, %s36
    %p47 = scmp.eq.s32.totalorder %s15, 0
    %p48 = por %p46, %p47
    %p49 = scmp.ne.s32.totalorder %s35, %s36
    %p50 = scmp.eq.s32.totalorder %s16, 3
    %p51 = por %p49, %p50
    %p53 = scmp.ne.s32.totalorder %s36, %s52
    %p54 = scmp.eq.s32.totalorder %s16, 0
    %p55 = por %p53, %p54
    %s56 = ssub.s32 %s18, %s25
    %p57 = scmp.eq.s32.totalorder %s56, 0
    %s59 = sadd.s32 %s58, 1
    %s60 = scalar_select %p57, %s58, %s59
    %p63 = pneg %p57
    %p64 = scmp.eq.s32.totalorder %s10, 3
    %p65 = por %p63, %p64
    %p66 = scmp.ne.s32.totalorder %s58, %s61
    %p67 = scmp.eq.s32.totalorder %s10, 0
    %p68 = por %p66, %p67
    %p69 = scmp.ne.s32.totalorder %s58, %s61
    %p70 = scmp.eq.s32.totalorder %s15, 3
    %p71 = por %p69, %p70
    %p72 = scmp.ne.s32.totalorder %s61, %s62
    %p73 = scmp.eq.s32.totalorder %s15, 0
    %p74 = por %p72, %p73
    %p75 = scmp.ne.s32.totalorder %s61, %s62
    %p76 = scmp.eq.s32.totalorder %s16, 3
    %p77 = por %p75, %p76
    %p79 = scmp.ne.s32.totalorder %s62, %s78
    %p80 = scmp.eq.s32.totalorder %s16, 0
    %p81 = por %p79, %p80
    %s82 = ssub.s32 %s18, %s25
    %p83 = scmp.eq.s32.totalorder %s82, 0
    %s85 = sadd.s32 %s84, 1
    %s86 = scalar_select %p83, %s84, %s85
    %p89 = pneg %p83
    %p90 = scmp.eq.s32.totalorder %s10, 3
    %p91 = por %p89, %p90
    %p92 = scmp.ne.s32.totalorder %s84, %s87
    %p93 = scmp.eq.s32.totalorder %s10, 0
    %p94 = por %p92, %p93
    %p95 = scmp.ne.s32.totalorder %s84, %s87
    %p96 = scmp.eq.s32.totalorder %s15, 3
    %p97 = por %p95, %p96
    %p98 = scmp.ne.s32.totalorder %s87, %s88
    %p99 = scmp.eq.s32.totalorder %s15, 0
    %p100 = por %p98, %p99
    %p101 = scmp.ne.s32.totalorder %s87, %s88
    %p102 = scmp.eq.s32.totalorder %s16, 3
    %p103 = por %p101, %p102
    %p105 = scmp.ne.s32.totalorder %s88, %s104
    %p106 = scmp.eq.s32.totalorder %s16, 0
    %p107 = por %p105, %p106
    %s108 = ssub.s32 %s17, %s29
    %s109 = ssub.s32 %s18, %s25
    %s110 = sor.u32 %s108, %s109
    %p111 = scmp.eq.s32.totalorder %s110, 0
    %s113 = sadd.s32 %s112, 1
    %s114 = scalar_select %p111, %s112, %s113
    %p117 = pneg %p111
    %p118 = scmp.eq.s32.totalorder %s10, 3
    %p119 = por %p117, %p118
    %p120 = scmp.ne.s32.totalorder %s112, %s115
    %p121 = scmp.eq.s32.totalorder %s10, 0
    %p122 = por %p120, %p121
    %p123 = scmp.ne.s32.totalorder %s112, %s115
    %p124 = scmp.eq.s32.totalorder %s15, 3
    %p125 = por %p123, %p124
    %p126 = scmp.ne.s32.totalorder %s115, %s116
    %p127 = scmp.eq.s32.totalorder %s15, 0
    %p128 = por %p126, %p127
    %p129 = scmp.ne.s32.totalorder %s115, %s116
    %p130 = scmp.eq.s32.totalorder %s16, 3
    %p131 = por %p129, %p130
    %p133 = scmp.ne.s32.totalorder %s116, %s132
    %p134 = scmp.eq.s32.totalorder %s16, 0
    %p135 = por %p133, %p134
    %s136 = ssub.s32 %s17, %s29
    %s137 = ssub.s32 %s18, %s25
    %s138 = sor.u32 %s136, %s137
    %p139 = scmp.eq.s32.totalorder %s138, 0
    %s141 = sadd.s32 %s140, 1
    %s142 = scalar_select %p139, %s140, %s141
    %p145 = pneg %p139
    %p146 = scmp.eq.s32.totalorder %s10, 3
    %p147 = por %p145, %p146
    %p148 = scmp.ne.s32.totalorder %s140, %s143
    %p149 = scmp.eq.s32.totalorder %s10, 0
    %p150 = por %p148, %p149
    %p151 = scmp.ne.s32.totalorder %s140, %s143
    %p152 = scmp.eq.s32.totalorder %s15, 3
    %p153 = por %p151, %p152
    %p154 = scmp.ne.s32.totalorder %s143, %s144
    %p155 = scmp.eq.s32.totalorder %s15, 0
    %p156 = por %p154, %p155
    %p157 = scmp.ne.s32.totalorder %s143, %s144
    %p158 = scmp.eq.s32.totalorder %s16, 3
    %p159 = por %p157, %p158
    %p161 = scmp.ne.s32.totalorder %s144, %s160
    %p162 = scmp.eq.s32.totalorder %s16, 0
    %p163 = por %p161, %p162
    %p164 = scmp.le.s32.totalorder 1, %s10
    %p165 = scmp.lt.s32.totalorder %s10, 5
    %p166 = pnand %p164, %p165
    %p167 = pneg %p166
    // Predicated region
    $region9: #{tpu_custom_call.1} parent=5 // pred_check
      _
    $region10: #{tpu_custom_call.1} parent=5 // pred_check_branch
      %169 = sbr.rel (%p166) target = $region12
    $region11: #{tpu_custom_call.1} parent=5 // pred_region
      %s170 = ssub.s32 %s10, 1
      // Predicated region
      $region13: #{tpu_custom_call.1} parent=11 // pred_check
        %p171 = pneg %p48
      $region14: #{tpu_custom_call.1} parent=11 // pred_check_branch
        %173 = sbr.rel (%p171) target = $region16
      $region15: #{tpu_custom_call.1} parent=11 // pred_region
        %p174 = scmp.lt.s32.totalorder %s19, 0
        %s175 = scalar_select %p174, %s19, 0
        %s176 = scalar_lea.vmem %s0, %s175
      $region16: #{tpu_custom_call.1} parent=11 // pred_fallthru
        _
    $region12: #{tpu_custom_call.1} parent=5 // pred_fallthru
      _
    %p177 = scmp.lt.s32.totalorder %s10, 4
    // Predicated region
    $region17: #{tpu_custom_call.1} parent=5 // pred_check
      %p178 = pneg %p177
    $region18: #{tpu_custom_call.1} parent=5 // pred_check_branch
      %180 = sbr.rel (%p178) target = $region20
    $region19: #{tpu_custom_call.1} parent=5 // pred_region
      // Predicated region
      $region21: #{tpu_custom_call.1} parent=19 // pred_check
        %p181 = pneg %p68
      $region22: #{tpu_custom_call.1} parent=19 // pred_check_branch
        %183 = sbr.rel (%p181) target = $region24
      $region23: #{tpu_custom_call.1} parent=19 // pred_region
        %s184 = smul.u32 15, %s18
        %p185 = scmp.lt.s32.totalorder %s184, 59
        %s186 = scalar_select %p185, %s184, 59
        %s187 = smul.addr %s186, 8
        %s188 = scalar_lea.vmem %s1, %s187
        %s189 = smul.u32 15, %s18
      $region24: #{tpu_custom_call.1} parent=19 // pred_fallthru
        _
      // Predicated region
      $region25: #{tpu_custom_call.1} parent=19 // pred_check
        %p190 = pneg %p94
      $region26: #{tpu_custom_call.1} parent=19 // pred_check_branch
        %192 = sbr.rel (%p190) target = $region28
      $region27: #{tpu_custom_call.1} parent=19 // pred_region
        %s193 = smul.u32 15, %s18
        %p194 = scmp.lt.s32.totalorder %s193, 59
        %s195 = scalar_select %p194, %s193, 59
        %s196 = smul.addr %s195, 8
        %s197 = scalar_lea.vmem %s2, %s196
        %s198 = smul.u32 15, %s18
      $region28: #{tpu_custom_call.1} parent=19 // pred_fallthru
        _
      // Predicated region
      $region29: #{tpu_custom_call.1} parent=19 // pred_check
        %p199 = pneg %p122
      $region30: #{tpu_custom_call.1} parent=19 // pred_check_branch
        %201 = sbr.rel (%p199) target = $region32
      $region31: #{tpu_custom_call.1} parent=19 // pred_region
        %s202 = smul.u32 15, %s18
        %p203 = scmp.lt.s32.totalorder %s17, 0
        %s204 = scalar_select %p203, %s17, 0
        %p205 = scmp.lt.s32.totalorder %s202, 59
        %s206 = scalar_select %p205, %s202, 59
        %s207 = smul.addr %s206, 7
        %s208 = smul.addr %s204, 420
        %s209 = sadd.s32 %s207, %s208
        %s210 = smul.addr %s209, 8
        %s211 = scalar_lea.vmem %s3, %s210
        %s212 = smul.u32 15, %s18
      $region32: #{tpu_custom_call.1} parent=19 // pred_fallthru
        _
    $region20: #{tpu_custom_call.1} parent=5 // pred_fallthru
      _
    %p213 = scmp.le.s32.totalorder 1, %s10
    %p214 = scmp.lt.s32.totalorder %s10, 5
    %p215 = pnand %p213, %p214
    %p216 = pneg %p215
    // Predicated region
    $region33: #{tpu_custom_call.1} parent=5 // pred_check
      _
    $region34: #{tpu_custom_call.1} parent=5 // pred_check_branch
      %218 = sbr.rel (%p215) target = $region36
    $region35: #{tpu_custom_call.1} parent=5 // pred_region
      %s219 = ssub.s32 %s10, 1
      %p220 = scmp.lt.s32.totalorder %s19, 0
      %s221 = scalar_select %p220, %s19, 0
      %s222 = scalar_lea.vmem %s0, %s221
      %p223 = pneg %p48
      %p224 = pneg %p45
      %s225 = smul.u32 15, %s20
      %p226 = scmp.lt.s32.totalorder %s225, 59
      %s227 = scalar_select %p226, %s225, 59
      %s228 = smul.addr %s227, 8
      %s229 = scalar_lea.vmem %s1, %s228
      %p230 = pneg %p74
      %p231 = pneg %p71
      %s232 = smul.u32 15, %s20
      %p233 = scmp.lt.s32.totalorder %s232, 59
      %s234 = scalar_select %p233, %s232, 59
      %s235 = smul.addr %s234, 8
      %s236 = scalar_lea.vmem %s2, %s235
      %p237 = pneg %p100
      %p238 = pneg %p97
      %s239 = smul.u32 15, %s20
      %p240 = scmp.lt.s32.totalorder %s19, 0
      %s241 = scalar_select %p240, %s19, 0
      %p242 = scmp.lt.s32.totalorder %s239, 59
      %s243 = scalar_select %p242, %s239, 59
      %s244 = smul.addr %s243, 7
      %s245 = smul.addr %s241, 420
      %s246 = sadd.s32 %s244, %s245
      %s247 = smul.addr %s246, 8
      %s248 = scalar_lea.vmem %s3, %s247
      %p249 = pneg %p128
      %p250 = pneg %p125
      %p251 = pneg %p156
      %p252 = pneg %p153
      %s253 = smul.u32 15, %s20
      %p254 = scmp.lt.s32.totalorder %s19, 0
      %s255 = scalar_select %p254, %s19, 0
      %p256 = scmp.lt.s32.totalorder %s253, 59
      %s257 = scalar_select %p256, %s253, 59
      %s258 = smul.addr %s257, 7
      %s259 = smul.addr %s255, 420
      %s260 = sadd.s32 %s258, %s259
      %s261 = smul.addr %s260, 8
      %s262 = scalar_lea.vmem %s4, %s261
      %p263 = scmp.lt.s32.totalorder %s19, 0
      %s264 = scalar_select %p263, %s19, 0
      %s265 = scalar_lea.vmem %s0, %s264
      %s266 = smul.u32 15, %s20
      %p267 = scmp.lt.s32.totalorder %s266, 59
      %s268 = scalar_select %p267, %s266, 59
      %s269 = smul.addr %s268, 8
      %s270 = scalar_lea.vmem %s1, %s269
      %s271 = smul.u32 15, %s20
      %s272 = smul.u32 15, %s20
      %p273 = scmp.lt.s32.totalorder %s272, 59
      %s274 = scalar_select %p273, %s272, 59
      %s275 = smul.addr %s274, 8
      %s276 = scalar_lea.vmem %s2, %s275
      %s277 = smul.u32 15, %s20
      %s278 = smul.u32 15, %s20
      %p279 = scmp.lt.s32.totalorder %s19, 0
      %s280 = scalar_select %p279, %s19, 0
      %p281 = scmp.lt.s32.totalorder %s278, 59
      %s282 = scalar_select %p281, %s278, 59
      %s283 = smul.addr %s282, 7
      %s284 = smul.addr %s280, 420
      %s285 = sadd.s32 %s283, %s284
      %s286 = smul.addr %s285, 8
      %s287 = scalar_lea.vmem %s3, %s286
      %s288 = smul.u32 15, %s20
      %s289 = smul.u32 15, %s20
      %p290 = scmp.lt.s32.totalorder %s19, 0
      %s291 = scalar_select %p290, %s19, 0
      %p292 = scmp.lt.s32.totalorder %s289, 59
      %s293 = scalar_select %p292, %s289, 59
      %s294 = smul.addr %s293, 7
      %s295 = smul.addr %s291, 420
      %s296 = sadd.s32 %s294, %s295
      %s297 = smul.addr %s296, 8
      %s298 = scalar_lea.vmem %s4, %s297
      %s299 = smul.u32 15, %s20
      %v300 = vld [vmem:[%s265] sm:$0x1]
      %v301 = vld [vmem:[%s270] sm:$0xff]
      %v302 = vld [vmem:[%s270 + $0x8] sm:$0xff]
      %v303 = vld [vmem:[%s270 + $0x10] sm:$0xff]
      %v304 = vld [vmem:[%s270 + $0x18] sm:$0xff]
      %v305 = vld [vmem:[%s270 + $0x20] sm:$0xff]
      %v306 = vld [vmem:[%s270 + $0x28] sm:$0xff]
      %v307 = vld [vmem:[%s270 + $0x30] sm:$0xff]
      %v308 = vld [vmem:[%s270 + $0x38] sm:$0xff]
      %v309 = vld [vmem:[%s270 + $0x40] sm:$0xff]
      %v310 = vld [vmem:[%s270 + $0x48] sm:$0xff]
      %v311 = vld [vmem:[%s270 + $0x50] sm:$0xff]
      %v312 = vld [vmem:[%s270 + $0x58] sm:$0xff]
      %v313 = vld [vmem:[%s270 + $0x60] sm:$0xff]
      %v314 = vld [vmem:[%s270 + $0x68] sm:$0xff]
      %v315 = vld [vmem:[%s270 + $0x70] sm:$0xff]
      %v317 = vlaneseq
      %v318 = vshrl.u32 %v317, 7
      %v319 = vsub.s32 0, %v318
      %v320 = vrot.slane %v300, %v319
      %v322 = vmul.f32 %v301, %v320
      %v323 = vmul.f32 %v302, %v320
      %v324 = vmul.f32 %v303, %v320
      %v325 = vmul.f32 %v304, %v320
      %v326 = vmul.f32 %v305, %v320
      %v327 = vmul.f32 %v306, %v320
      %v328 = vmul.f32 %v307, %v320
      %v329 = vmul.f32 %v308, %v320
      %v330 = vmul.f32 %v309, %v320
      %v331 = vmul.f32 %v310, %v320
      %v332 = vmul.f32 %v311, %v320
      %v333 = vmul.f32 %v312, %v320
      %v334 = vmul.f32 %v313, %v320
      %v335 = vmul.f32 %v314, %v320
      %v336 = vmul.f32 %v315, %v320
      %vm337 = vcmask 162816
      %v338 = vsel %vm337, %v322, 0.0
      %339 = vadd.xlane.f32.xlu0 %v338
      %v340 = vpop.xlane.xlu0 %339
      %v341 = vsel %vm337, %v323, 0.0
      %342 = vadd.xlane.f32.xlu0 %v341
      %v343 = vpop.xlane.xlu0 %342
      %v344 = vsel %vm337, %v324, 0.0
      %345 = vadd.xlane.f32.xlu0 %v344
      %v346 = vpop.xlane.xlu0 %345
      %v347 = vsel %vm337, %v325, 0.0
      %348 = vadd.xlane.f32.xlu0 %v347
      %v349 = vpop.xlane.xlu0 %348
      %v350 = vsel %vm337, %v326, 0.0
      %351 = vadd.xlane.f32.xlu0 %v350
      %v352 = vpop.xlane.xlu0 %351
      %v353 = vsel %vm337, %v327, 0.0
      %354 = vadd.xlane.f32.xlu0 %v353
      %v355 = vpop.xlane.xlu0 %354
      %v356 = vsel %vm337, %v328, 0.0
      %357 = vadd.xlane.f32.xlu0 %v356
      %v358 = vpop.xlane.xlu0 %357
      %v359 = vsel %vm337, %v329, 0.0
      %360 = vadd.xlane.f32.xlu0 %v359
      %v361 = vpop.xlane.xlu0 %360
      %v362 = vsel %vm337, %v330, 0.0
      %363 = vadd.xlane.f32.xlu0 %v362
      %v364 = vpop.xlane.xlu0 %363
      %v365 = vsel %vm337, %v331, 0.0
      %366 = vadd.xlane.f32.xlu0 %v365
      %v367 = vpop.xlane.xlu0 %366
      %v368 = vsel %vm337, %v332, 0.0
      %369 = vadd.xlane.f32.xlu0 %v368
      %v370 = vpop.xlane.xlu0 %369
      %v371 = vsel %vm337, %v333, 0.0
      %372 = vadd.xlane.f32.xlu0 %v371
      %v373 = vpop.xlane.xlu0 %372
      %v374 = vsel %vm337, %v334, 0.0
      %375 = vadd.xlane.f32.xlu0 %v374
      %v376 = vpop.xlane.xlu0 %375
      %v377 = vsel %vm337, %v335, 0.0
      %378 = vadd.xlane.f32.xlu0 %v377
      %v379 = vpop.xlane.xlu0 %378
      %v380 = vsel %vm337, %v336, 0.0
      %381 = vadd.xlane.f32.xlu0 %v380
      %v382 = vpop.xlane.xlu0 %381
      %v383 = vld [vmem:[%s276] sm:$0xff]
      %v384 = vld [vmem:[%s276 + $0x8] sm:$0xff]
      %v385 = vld [vmem:[%s276 + $0x10] sm:$0xff]
      %v386 = vld [vmem:[%s276 + $0x18] sm:$0xff]
      %v387 = vld [vmem:[%s276 + $0x20] sm:$0xff]
      %v388 = vld [vmem:[%s276 + $0x28] sm:$0xff]
      %v389 = vld [vmem:[%s276 + $0x30] sm:$0xff]
      %v390 = vld [vmem:[%s276 + $0x38] sm:$0xff]
      %v391 = vld [vmem:[%s276 + $0x40] sm:$0xff]
      %v392 = vld [vmem:[%s276 + $0x48] sm:$0xff]
      %v393 = vld [vmem:[%s276 + $0x50] sm:$0xff]
      %v394 = vld [vmem:[%s276 + $0x58] sm:$0xff]
      %v395 = vld [vmem:[%s276 + $0x60] sm:$0xff]
      %v396 = vld [vmem:[%s276 + $0x68] sm:$0xff]
      %v397 = vld [vmem:[%s276 + $0x70] sm:$0xff]
      %v398 = vadd.f32 %v340, %v383
      %v399 = vadd.f32 %v343, %v384
      %v400 = vadd.f32 %v346, %v385
      %v401 = vadd.f32 %v349, %v386
      %v402 = vadd.f32 %v352, %v387
      %v403 = vadd.f32 %v355, %v388
      %v404 = vadd.f32 %v358, %v389
      %v405 = vadd.f32 %v361, %v390
      %v406 = vadd.f32 %v364, %v391
      %v407 = vadd.f32 %v367, %v392
      %v408 = vadd.f32 %v370, %v393
      %v409 = vadd.f32 %v373, %v394
      %v410 = vadd.f32 %v376, %v395
      %v411 = vadd.f32 %v379, %v396
      %v412 = vadd.f32 %v382, %v397
      %v413 = vxor.u32 %v398, 2147483648
      %v414 = vxor.u32 %v399, 2147483648
      %v415 = vxor.u32 %v400, 2147483648
      %v416 = vxor.u32 %v401, 2147483648
      %v417 = vxor.u32 %v402, 2147483648
      %v418 = vxor.u32 %v403, 2147483648
      %v419 = vxor.u32 %v404, 2147483648
      %v420 = vxor.u32 %v405, 2147483648
      %v421 = vxor.u32 %v406, 2147483648
      %v422 = vxor.u32 %v407, 2147483648
      %v423 = vxor.u32 %v408, 2147483648
      %v424 = vxor.u32 %v409, 2147483648
      %v425 = vxor.u32 %v410, 2147483648
      %v426 = vxor.u32 %v411, 2147483648
      %v427 = vxor.u32 %v412, 2147483648
      %v428 = vmul.f32 %v413, 1.442695
      %v429 = vpow.pop %v428
      %v430 = vmul.f32 %v414, 1.442695
      %v431 = vpow.pop %v430
      %v432 = vmul.f32 %v415, 1.442695
      %v433 = vpow.pop %v432
      %v434 = vmul.f32 %v416, 1.442695
      %v435 = vpow.pop %v434
      %v436 = vmul.f32 %v417, 1.442695
      %v437 = vpow.pop %v436
      %v438 = vmul.f32 %v418, 1.442695
      %v439 = vpow.pop %v438
      %v440 = vmul.f32 %v419, 1.442695
      %v441 = vpow.pop %v440
      %v442 = vmul.f32 %v420, 1.442695
      %v443 = vpow.pop %v442
      %v444 = vmul.f32 %v421, 1.442695
      %v445 = vpow.pop %v444
      %v446 = vmul.f32 %v422, 1.442695
      %v447 = vpow.pop %v446
      %v448 = vmul.f32 %v423, 1.442695
      %v449 = vpow.pop %v448
      %v450 = vmul.f32 %v424, 1.442695
      %v451 = vpow.pop %v450
      %v452 = vmul.f32 %v425, 1.442695
      %v453 = vpow.pop %v452
      %v454 = vmul.f32 %v426, 1.442695
      %v455 = vpow.pop %v454
      %v456 = vmul.f32 %v427, 1.442695
      %v457 = vpow.pop %v456
      %v458 = vadd.f32 %v429, 1.0
      %v459 = vadd.f32 %v431, 1.0
      %v460 = vadd.f32 %v433, 1.0
      %v461 = vadd.f32 %v435, 1.0
      %v462 = vadd.f32 %v437, 1.0
      %v463 = vadd.f32 %v439, 1.0
      %v464 = vadd.f32 %v441, 1.0
      %v465 = vadd.f32 %v443, 1.0
      %v466 = vadd.f32 %v445, 1.0
      %v467 = vadd.f32 %v447, 1.0
      %v468 = vadd.f32 %v449, 1.0
      %v469 = vadd.f32 %v451, 1.0
      %v470 = vadd.f32 %v453, 1.0
      %v471 = vadd.f32 %v455, 1.0
      %v472 = vadd.f32 %v457, 1.0
      %v473 = vrcp.pop %v458
      %v474 = vmul.f32 1.0, %v473
      %v475 = vrcp.pop %v459
      %v476 = vmul.f32 1.0, %v475
      %v477 = vrcp.pop %v460
      %v478 = vmul.f32 1.0, %v477
      %v479 = vrcp.pop %v461
      %v480 = vmul.f32 1.0, %v479
      %v481 = vrcp.pop %v462
      %v482 = vmul.f32 1.0, %v481
      %v483 = vrcp.pop %v463
      %v484 = vmul.f32 1.0, %v483
      %v485 = vrcp.pop %v464
      %v486 = vmul.f32 1.0, %v485
      %v487 = vrcp.pop %v465
      %v488 = vmul.f32 1.0, %v487
      %v489 = vrcp.pop %v466
      %v490 = vmul.f32 1.0, %v489
      %v491 = vrcp.pop %v467
      %v492 = vmul.f32 1.0, %v491
      %v493 = vrcp.pop %v468
      %v494 = vmul.f32 1.0, %v493
      %v495 = vrcp.pop %v469
      %v496 = vmul.f32 1.0, %v495
      %v497 = vrcp.pop %v470
      %v498 = vmul.f32 1.0, %v497
      %v499 = vrcp.pop %v471
      %v500 = vmul.f32 1.0, %v499
      %v501 = vrcp.pop %v472
      %v502 = vmul.f32 1.0, %v501
      %v503 = vld [vmem:[%s287] sm:$0xff]
      %v504 = vld [vmem:[%s287 + $0x8] sm:$0xff]
      %v505 = vld [vmem:[%s287 + $0x10] sm:$0xff]
      %v506 = vld [vmem:[%s287 + $0x18] sm:$0xff]
      %v507 = vld [vmem:[%s287 + $0x20] sm:$0xff]
      %v508 = vld [vmem:[%s287 + $0x28] sm:$0xff]
      %v509 = vld [vmem:[%s287 + $0x30] sm:$0xff]
      %v510 = vld [vmem:[%s287 + $0x38] sm:$0xff]
      %v511 = vld [vmem:[%s287 + $0x40] sm:$0xff]
      %v512 = vld [vmem:[%s287 + $0x48] sm:$0xff]
      %v513 = vld [vmem:[%s287 + $0x50] sm:$0xff]
      %v514 = vld [vmem:[%s287 + $0x58] sm:$0xff]
      %v515 = vld [vmem:[%s287 + $0x60] sm:$0xff]
      %v516 = vld [vmem:[%s287 + $0x68] sm:$0xff]
      %v517 = vld [vmem:[%s287 + $0x70] sm:$0xff]
      %v518 = vld [vmem:[%s287 + $0x78] sm:$0xff]
      %v519 = vld [vmem:[%s287 + $0x80] sm:$0xff]
      %v520 = vld [vmem:[%s287 + $0x88] sm:$0xff]
      %v521 = vld [vmem:[%s287 + $0x90] sm:$0xff]
      %v522 = vld [vmem:[%s287 + $0x98] sm:$0xff]
      %v523 = vld [vmem:[%s287 + $0xa0] sm:$0xff]
      %v524 = vld [vmem:[%s287 + $0xa8] sm:$0xff]
      %v525 = vld [vmem:[%s287 + $0xb0] sm:$0xff]
      %v526 = vld [vmem:[%s287 + $0xb8] sm:$0xff]
      %v527 = vld [vmem:[%s287 + $0xc0] sm:$0xff]
      %v528 = vld [vmem:[%s287 + $0xc8] sm:$0xff]
      %v529 = vld [vmem:[%s287 + $0xd0] sm:$0xff]
      %v530 = vld [vmem:[%s287 + $0xd8] sm:$0xff]
      %v531 = vld [vmem:[%s287 + $0xe0] sm:$0xff]
      %v532 = vld [vmem:[%s287 + $0xe8] sm:$0xff]
      %v533 = vld [vmem:[%s287 + $0xf0] sm:$0xff]
      %v534 = vld [vmem:[%s287 + $0xf8] sm:$0xff]
      %v535 = vld [vmem:[%s287 + $0x100] sm:$0xff]
      %v536 = vld [vmem:[%s287 + $0x108] sm:$0xff]
      %v537 = vld [vmem:[%s287 + $0x110] sm:$0xff]
      %v538 = vld [vmem:[%s287 + $0x118] sm:$0xff]
      %v539 = vld [vmem:[%s287 + $0x120] sm:$0xff]
      %v540 = vld [vmem:[%s287 + $0x128] sm:$0xff]
      %v541 = vld [vmem:[%s287 + $0x130] sm:$0xff]
      %v542 = vld [vmem:[%s287 + $0x138] sm:$0xff]
      %v543 = vld [vmem:[%s287 + $0x140] sm:$0xff]
      %v544 = vld [vmem:[%s287 + $0x148] sm:$0xff]
      %v545 = vld [vmem:[%s287 + $0x150] sm:$0xff]
      %v546 = vld [vmem:[%s287 + $0x158] sm:$0xff]
      %v547 = vld [vmem:[%s287 + $0x160] sm:$0xff]
      %v548 = vld [vmem:[%s287 + $0x168] sm:$0xff]
      %v549 = vld [vmem:[%s287 + $0x170] sm:$0xff]
      %v550 = vld [vmem:[%s287 + $0x178] sm:$0xff]
      %v551 = vld [vmem:[%s287 + $0x180] sm:$0xff]
      %v552 = vld [vmem:[%s287 + $0x188] sm:$0xff]
      %v553 = vld [vmem:[%s287 + $0x190] sm:$0xff]
      %v554 = vld [vmem:[%s287 + $0x198] sm:$0xff]
      %v555 = vld [vmem:[%s287 + $0x1a0] sm:$0xff]
      %v556 = vld [vmem:[%s287 + $0x1a8] sm:$0xff]
      %v557 = vld [vmem:[%s287 + $0x1b0] sm:$0xff]
      %v558 = vld [vmem:[%s287 + $0x1b8] sm:$0xff]
      %v559 = vld [vmem:[%s287 + $0x1c0] sm:$0xff]
      %v560 = vld [vmem:[%s287 + $0x1c8] sm:$0xff]
      %v561 = vld [vmem:[%s287 + $0x1d0] sm:$0xff]
      %v562 = vld [vmem:[%s287 + $0x1d8] sm:$0xff]
      %v563 = vld [vmem:[%s287 + $0x1e0] sm:$0xff]
      %v564 = vld [vmem:[%s287 + $0x1e8] sm:$0xff]
      %v565 = vld [vmem:[%s287 + $0x1f0] sm:$0xff]
      %v566 = vld [vmem:[%s287 + $0x1f8] sm:$0xff]
      %v567 = vld [vmem:[%s287 + $0x200] sm:$0xff]
      %v568 = vld [vmem:[%s287 + $0x208] sm:$0xff]
      %v569 = vld [vmem:[%s287 + $0x210] sm:$0xff]
      %v570 = vld [vmem:[%s287 + $0x218] sm:$0xff]
      %v571 = vld [vmem:[%s287 + $0x220] sm:$0xff]
      %v572 = vld [vmem:[%s287 + $0x228] sm:$0xff]
      %v573 = vld [vmem:[%s287 + $0x230] sm:$0xff]
      %v574 = vld [vmem:[%s287 + $0x238] sm:$0xff]
      %v575 = vld [vmem:[%s287 + $0x240] sm:$0xff]
      %v576 = vld [vmem:[%s287 + $0x248] sm:$0xff]
      %v577 = vld [vmem:[%s287 + $0x250] sm:$0xff]
      %v578 = vld [vmem:[%s287 + $0x258] sm:$0xff]
      %v579 = vld [vmem:[%s287 + $0x260] sm:$0xff]
      %v580 = vld [vmem:[%s287 + $0x268] sm:$0xff]
      %v581 = vld [vmem:[%s287 + $0x270] sm:$0xff]
      %v582 = vld [vmem:[%s287 + $0x278] sm:$0xff]
      %v583 = vld [vmem:[%s287 + $0x280] sm:$0xff]
      %v584 = vld [vmem:[%s287 + $0x288] sm:$0xff]
      %v585 = vld [vmem:[%s287 + $0x290] sm:$0xff]
      %v586 = vld [vmem:[%s287 + $0x298] sm:$0xff]
      %v587 = vld [vmem:[%s287 + $0x2a0] sm:$0xff]
      %v588 = vld [vmem:[%s287 + $0x2a8] sm:$0xff]
      %v589 = vld [vmem:[%s287 + $0x2b0] sm:$0xff]
      %v590 = vld [vmem:[%s287 + $0x2b8] sm:$0xff]
      %v591 = vld [vmem:[%s287 + $0x2c0] sm:$0xff]
      %v592 = vld [vmem:[%s287 + $0x2c8] sm:$0xff]
      %v593 = vld [vmem:[%s287 + $0x2d0] sm:$0xff]
      %v594 = vld [vmem:[%s287 + $0x2d8] sm:$0xff]
      %v595 = vld [vmem:[%s287 + $0x2e0] sm:$0xff]
      %v596 = vld [vmem:[%s287 + $0x2e8] sm:$0xff]
      %v597 = vld [vmem:[%s287 + $0x2f0] sm:$0xff]
      %v598 = vld [vmem:[%s287 + $0x2f8] sm:$0xff]
      %v599 = vld [vmem:[%s287 + $0x300] sm:$0xff]
      %v600 = vld [vmem:[%s287 + $0x308] sm:$0xff]
      %v601 = vld [vmem:[%s287 + $0x310] sm:$0xff]
      %v602 = vld [vmem:[%s287 + $0x318] sm:$0xff]
      %v603 = vld [vmem:[%s287 + $0x320] sm:$0xff]
      %v604 = vld [vmem:[%s287 + $0x328] sm:$0xff]
      %v605 = vld [vmem:[%s287 + $0x330] sm:$0xff]
      %v606 = vld [vmem:[%s287 + $0x338] sm:$0xff]
      %v607 = vld [vmem:[%s287 + $0x340] sm:$0xff]
      %609 = vset.pattern.permute.xlu0 0
      %610 = vperm.xlu0 %609, %v474
      %v611 = vpop.permute.xlu0 %610
      %614 = vset.pattern.permute.xlu0 0
      %615 = vperm.xlu0 %614, %v476
      %v616 = vpop.permute.xlu0 %615
      %619 = vset.pattern.permute.xlu0 0
      %620 = vperm.xlu0 %619, %v478
      %v621 = vpop.permute.xlu0 %620
      %624 = vset.pattern.permute.xlu0 0
      %625 = vperm.xlu0 %624, %v480
      %v626 = vpop.permute.xlu0 %625
      %629 = vset.pattern.permute.xlu0 0
      %630 = vperm.xlu0 %629, %v482
      %v631 = vpop.permute.xlu0 %630
      %634 = vset.pattern.permute.xlu0 0
      %635 = vperm.xlu0 %634, %v484
      %v636 = vpop.permute.xlu0 %635
      %639 = vset.pattern.permute.xlu0 0
      %640 = vperm.xlu0 %639, %v486
      %v641 = vpop.permute.xlu0 %640
      %644 = vset.pattern.permute.xlu0 0
      %645 = vperm.xlu0 %644, %v488
      %v646 = vpop.permute.xlu0 %645
      %649 = vset.pattern.permute.xlu0 0
      %650 = vperm.xlu0 %649, %v490
      %v651 = vpop.permute.xlu0 %650
      %654 = vset.pattern.permute.xlu0 0
      %655 = vperm.xlu0 %654, %v492
      %v656 = vpop.permute.xlu0 %655
      %659 = vset.pattern.permute.xlu0 0
      %660 = vperm.xlu0 %659, %v494
      %v661 = vpop.permute.xlu0 %660
      %664 = vset.pattern.permute.xlu0 0
      %665 = vperm.xlu0 %664, %v496
      %v666 = vpop.permute.xlu0 %665
      %669 = vset.pattern.permute.xlu0 0
      %670 = vperm.xlu0 %669, %v498
      %v671 = vpop.permute.xlu0 %670
      %674 = vset.pattern.permute.xlu0 0
      %675 = vperm.xlu0 %674, %v500
      %v676 = vpop.permute.xlu0 %675
      %679 = vset.pattern.permute.xlu0 0
      %680 = vperm.xlu0 %679, %v502
      %v681 = vpop.permute.xlu0 %680
      %v683 = vmul.f32 %v503, %v611
      %v684 = vmul.f32 %v504, %v611
      %v685 = vmul.f32 %v505, %v611
      %v686 = vmul.f32 %v506, %v611
      %v687 = vmul.f32 %v507, %v611
      %v688 = vmul.f32 %v508, %v611
      %v689 = vmul.f32 %v509, %v611
      %v690 = vmul.f32 %v510, %v616
      %v691 = vmul.f32 %v511, %v616
      %v692 = vmul.f32 %v512, %v616
      %v693 = vmul.f32 %v513, %v616
      %v694 = vmul.f32 %v514, %v616
      %v695 = vmul.f32 %v515, %v616
      %v696 = vmul.f32 %v516, %v616
      %v697 = vmul.f32 %v517, %v621
      %v698 = vmul.f32 %v518, %v621
      %v699 = vmul.f32 %v519, %v621
      %v700 = vmul.f32 %v520, %v621
      %v701 = vmul.f32 %v521, %v621
      %v702 = vmul.f32 %v522, %v621
      %v703 = vmul.f32 %v523, %v621
      %v704 = vmul.f32 %v524, %v626
      %v705 = vmul.f32 %v525, %v626
      %v706 = vmul.f32 %v526, %v626
      %v707 = vmul.f32 %v527, %v626
      %v708 = vmul.f32 %v528, %v626
      %v709 = vmul.f32 %v529, %v626
      %v710 = vmul.f32 %v530, %v626
      %v711 = vmul.f32 %v531, %v631
      %v712 = vmul.f32 %v532, %v631
      %v713 = vmul.f32 %v533, %v631
      %v714 = vmul.f32 %v534, %v631
      %v715 = vmul.f32 %v535, %v631
      %v716 = vmul.f32 %v536, %v631
      %v717 = vmul.f32 %v537, %v631
      %v718 = vmul.f32 %v538, %v636
      %v719 = vmul.f32 %v539, %v636
      %v720 = vmul.f32 %v540, %v636
      %v721 = vmul.f32 %v541, %v636
      %v722 = vmul.f32 %v542, %v636
      %v723 = vmul.f32 %v543, %v636
      %v724 = vmul.f32 %v544, %v636
      %v725 = vmul.f32 %v545, %v641
      %v726 = vmul.f32 %v546, %v641
      %v727 = vmul.f32 %v547, %v641
      %v728 = vmul.f32 %v548, %v641
      %v729 = vmul.f32 %v549, %v641
      %v730 = vmul.f32 %v550, %v641
      %v731 = vmul.f32 %v551, %v641
      %v732 = vmul.f32 %v552, %v646
      %v733 = vmul.f32 %v553, %v646
      %v734 = vmul.f32 %v554, %v646
      %v735 = vmul.f32 %v555, %v646
      %v736 = vmul.f32 %v556, %v646
      %v737 = vmul.f32 %v557, %v646
      %v738 = vmul.f32 %v558, %v646
      %v739 = vmul.f32 %v559, %v651
      %v740 = vmul.f32 %v560, %v651
      %v741 = vmul.f32 %v561, %v651
      %v742 = vmul.f32 %v562, %v651
      %v743 = vmul.f32 %v563, %v651
      %v744 = vmul.f32 %v564, %v651
      %v745 = vmul.f32 %v565, %v651
      %v746 = vmul.f32 %v566, %v656
      %v747 = vmul.f32 %v567, %v656
      %v748 = vmul.f32 %v568, %v656
      %v749 = vmul.f32 %v569, %v656
      %v750 = vmul.f32 %v570, %v656
      %v751 = vmul.f32 %v571, %v656
      %v752 = vmul.f32 %v572, %v656
      %v753 = vmul.f32 %v573, %v661
      %v754 = vmul.f32 %v574, %v661
      %v755 = vmul.f32 %v575, %v661
      %v756 = vmul.f32 %v576, %v661
      %v757 = vmul.f32 %v577, %v661
      %v758 = vmul.f32 %v578, %v661
      %v759 = vmul.f32 %v579, %v661
      %v760 = vmul.f32 %v580, %v666
      %v761 = vmul.f32 %v581, %v666
      %v762 = vmul.f32 %v582, %v666
      %v763 = vmul.f32 %v583, %v666
      %v764 = vmul.f32 %v584, %v666
      %v765 = vmul.f32 %v585, %v666
      %v766 = vmul.f32 %v586, %v666
      %v767 = vmul.f32 %v587, %v671
      %v768 = vmul.f32 %v588, %v671
      %v769 = vmul.f32 %v589, %v671
      %v770 = vmul.f32 %v590, %v671
      %v771 = vmul.f32 %v591, %v671
      %v772 = vmul.f32 %v592, %v671
      %v773 = vmul.f32 %v593, %v671
      %v774 = vmul.f32 %v594, %v676
      %v775 = vmul.f32 %v595, %v676
      %v776 = vmul.f32 %v596, %v676
      %v777 = vmul.f32 %v597, %v676
      %v778 = vmul.f32 %v598, %v676
      %v779 = vmul.f32 %v599, %v676
      %v780 = vmul.f32 %v600, %v676
      %v781 = vmul.f32 %v601, %v681
      %v782 = vmul.f32 %v602, %v681
      %v783 = vmul.f32 %v603, %v681
      %v784 = vmul.f32 %v604, %v681
      %v785 = vmul.f32 %v605, %v681
      %v786 = vmul.f32 %v606, %v681
      %v787 = vmul.f32 %v607, %v681
      %788 = vst [vmem:[%s298] sm:$0xff] %v683
      %789 = vst [vmem:[%s298 + $0x8] sm:$0xff] %v684
      %790 = vst [vmem:[%s298 + $0x10] sm:$0xff] %v685
      %791 = vst [vmem:[%s298 + $0x18] sm:$0xff] %v686
      %792 = vst [vmem:[%s298 + $0x20] sm:$0xff] %v687
      %793 = vst [vmem:[%s298 + $0x28] sm:$0xff] %v688
      %vm794 = vcmask 130048
      %795 = vst.msk [vmem:[%s298 + $0x30] sm:$0xff] %vm794, %v689
      %796 = vst [vmem:[%s298 + $0x38] sm:$0xff] %v690
      %797 = vst [vmem:[%s298 + $0x40] sm:$0xff] %v691
      %798 = vst [vmem:[%s298 + $0x48] sm:$0xff] %v692
      %799 = vst [vmem:[%s298 + $0x50] sm:$0xff] %v693
      %800 = vst [vmem:[%s298 + $0x58] sm:$0xff] %v694
      %801 = vst [vmem:[%s298 + $0x60] sm:$0xff] %v695
      %802 = vst.msk [vmem:[%s298 + $0x68] sm:$0xff] %vm794, %v696
      %803 = vst [vmem:[%s298 + $0x70] sm:$0xff] %v697
      %804 = vst [vmem:[%s298 + $0x78] sm:$0xff] %v698
      %805 = vst [vmem:[%s298 + $0x80] sm:$0xff] %v699
      %806 = vst [vmem:[%s298 + $0x88] sm:$0xff] %v700
      %807 = vst [vmem:[%s298 + $0x90] sm:$0xff] %v701
      %808 = vst [vmem:[%s298 + $0x98] sm:$0xff] %v702
      %809 = vst.msk [vmem:[%s298 + $0xa0] sm:$0xff] %vm794, %v703
      %810 = vst [vmem:[%s298 + $0xa8] sm:$0xff] %v704
      %811 = vst [vmem:[%s298 + $0xb0] sm:$0xff] %v705
      %812 = vst [vmem:[%s298 + $0xb8] sm:$0xff] %v706
      %813 = vst [vmem:[%s298 + $0xc0] sm:$0xff] %v707
      %814 = vst [vmem:[%s298 + $0xc8] sm:$0xff] %v708
      %815 = vst [vmem:[%s298 + $0xd0] sm:$0xff] %v709
      %816 = vst.msk [vmem:[%s298 + $0xd8] sm:$0xff] %vm794, %v710
      %817 = vst [vmem:[%s298 + $0xe0] sm:$0xff] %v711
      %818 = vst [vmem:[%s298 + $0xe8] sm:$0xff] %v712
      %819 = vst [vmem:[%s298 + $0xf0] sm:$0xff] %v713
      %820 = vst [vmem:[%s298 + $0xf8] sm:$0xff] %v714
      %821 = vst [vmem:[%s298 + $0x100] sm:$0xff] %v715
      %822 = vst [vmem:[%s298 + $0x108] sm:$0xff] %v716
      %823 = vst.msk [vmem:[%s298 + $0x110] sm:$0xff] %vm794, %v717
      %824 = vst [vmem:[%s298 + $0x118] sm:$0xff] %v718
      %825 = vst [vmem:[%s298 + $0x120] sm:$0xff] %v719
      %826 = vst [vmem:[%s298 + $0x128] sm:$0xff] %v720
      %827 = vst [vmem:[%s298 + $0x130] sm:$0xff] %v721
      %828 = vst [vmem:[%s298 + $0x138] sm:$0xff] %v722
      %829 = vst [vmem:[%s298 + $0x140] sm:$0xff] %v723
      %830 = vst.msk [vmem:[%s298 + $0x148] sm:$0xff] %vm794, %v724
      %831 = vst [vmem:[%s298 + $0x150] sm:$0xff] %v725
      %832 = vst [vmem:[%s298 + $0x158] sm:$0xff] %v726
      %833 = vst [vmem:[%s298 + $0x160] sm:$0xff] %v727
      %834 = vst [vmem:[%s298 + $0x168] sm:$0xff] %v728
      %835 = vst [vmem:[%s298 + $0x170] sm:$0xff] %v729
      %836 = vst [vmem:[%s298 + $0x178] sm:$0xff] %v730
      %837 = vst.msk [vmem:[%s298 + $0x180] sm:$0xff] %vm794, %v731
      %838 = vst [vmem:[%s298 + $0x188] sm:$0xff] %v732
      %839 = vst [vmem:[%s298 + $0x190] sm:$0xff] %v733
      %840 = vst [vmem:[%s298 + $0x198] sm:$0xff] %v734
      %841 = vst [vmem:[%s298 + $0x1a0] sm:$0xff] %v735
      %842 = vst [vmem:[%s298 + $0x1a8] sm:$0xff] %v736
      %843 = vst [vmem:[%s298 + $0x1b0] sm:$0xff] %v737
      %844 = vst.msk [vmem:[%s298 + $0x1b8] sm:$0xff] %vm794, %v738
      %845 = vst [vmem:[%s298 + $0x1c0] sm:$0xff] %v739
      %846 = vst [vmem:[%s298 + $0x1c8] sm:$0xff] %v740
      %847 = vst [vmem:[%s298 + $0x1d0] sm:$0xff] %v741
      %848 = vst [vmem:[%s298 + $0x1d8] sm:$0xff] %v742
      %849 = vst [vmem:[%s298 + $0x1e0] sm:$0xff] %v743
      %850 = vst [vmem:[%s298 + $0x1e8] sm:$0xff] %v744
      %851 = vst.msk [vmem:[%s298 + $0x1f0] sm:$0xff] %vm794, %v745
      %852 = vst [vmem:[%s298 + $0x1f8] sm:$0xff] %v746
      %853 = vst [vmem:[%s298 + $0x200] sm:$0xff] %v747
      %854 = vst [vmem:[%s298 + $0x208] sm:$0xff] %v748
      %855 = vst [vmem:[%s298 + $0x210] sm:$0xff] %v749
      %856 = vst [vmem:[%s298 + $0x218] sm:$0xff] %v750
      %857 = vst [vmem:[%s298 + $0x220] sm:$0xff] %v751
      %858 = vst.msk [vmem:[%s298 + $0x228] sm:$0xff] %vm794, %v752
      %859 = vst [vmem:[%s298 + $0x230] sm:$0xff] %v753
      %860 = vst [vmem:[%s298 + $0x238] sm:$0xff] %v754
      %861 = vst [vmem:[%s298 + $0x240] sm:$0xff] %v755
      %862 = vst [vmem:[%s298 + $0x248] sm:$0xff] %v756
      %863 = vst [vmem:[%s298 + $0x250] sm:$0xff] %v757
      %864 = vst [vmem:[%s298 + $0x258] sm:$0xff] %v758
      %865 = vst.msk [vmem:[%s298 + $0x260] sm:$0xff] %vm794, %v759
      %866 = vst [vmem:[%s298 + $0x268] sm:$0xff] %v760
      %867 = vst [vmem:[%s298 + $0x270] sm:$0xff] %v761
      %868 = vst [vmem:[%s298 + $0x278] sm:$0xff] %v762
      %869 = vst [vmem:[%s298 + $0x280] sm:$0xff] %v763
      %870 = vst [vmem:[%s298 + $0x288] sm:$0xff] %v764
      %871 = vst [vmem:[%s298 + $0x290] sm:$0xff] %v765
      %872 = vst.msk [vmem:[%s298 + $0x298] sm:$0xff] %vm794, %v766
      %873 = vst [vmem:[%s298 + $0x2a0] sm:$0xff] %v767
      %874 = vst [vmem:[%s298 + $0x2a8] sm:$0xff] %v768
      %875 = vst [vmem:[%s298 + $0x2b0] sm:$0xff] %v769
      %876 = vst [vmem:[%s298 + $0x2b8] sm:$0xff] %v770
      %877 = vst [vmem:[%s298 + $0x2c0] sm:$0xff] %v771
      %878 = vst [vmem:[%s298 + $0x2c8] sm:$0xff] %v772
      %879 = vst.msk [vmem:[%s298 + $0x2d0] sm:$0xff] %vm794, %v773
      %880 = vst [vmem:[%s298 + $0x2d8] sm:$0xff] %v774
      %881 = vst [vmem:[%s298 + $0x2e0] sm:$0xff] %v775
      %882 = vst [vmem:[%s298 + $0x2e8] sm:$0xff] %v776
      %883 = vst [vmem:[%s298 + $0x2f0] sm:$0xff] %v777
      %884 = vst [vmem:[%s298 + $0x2f8] sm:$0xff] %v778
      %885 = vst [vmem:[%s298 + $0x300] sm:$0xff] %v779
      %886 = vst.msk [vmem:[%s298 + $0x308] sm:$0xff] %vm794, %v780
      %887 = vst [vmem:[%s298 + $0x310] sm:$0xff] %v781
      %888 = vst [vmem:[%s298 + $0x318] sm:$0xff] %v782
      %889 = vst [vmem:[%s298 + $0x320] sm:$0xff] %v783
      %890 = vst [vmem:[%s298 + $0x328] sm:$0xff] %v784
      %891 = vst [vmem:[%s298 + $0x330] sm:$0xff] %v785
      %892 = vst [vmem:[%s298 + $0x338] sm:$0xff] %v786
      %893 = vst.msk [vmem:[%s298 + $0x340] sm:$0xff] %vm794, %v787
      %s894 = smul.u32 15, %s20
      %p895 = scmp.lt.s32.totalorder %s19, 0
      %s896 = scalar_select %p895, %s19, 0
      %p897 = scmp.lt.s32.totalorder %s894, 59
      %s898 = scalar_select %p897, %s894, 59
      %s899 = smul.addr %s898, 7
      %s900 = smul.addr %s896, 420
      %s901 = sadd.s32 %s899, %s900
      %s902 = smul.addr %s901, 8
      %s903 = scalar_lea.vmem %s4, %s902
      // Predicated region
      $region37: #{tpu_custom_call.1} parent=35 // pred_check
        %p904 = pneg %p153
      $region38: #{tpu_custom_call.1} parent=35 // pred_check_branch
        %906 = sbr.rel (%p904) target = $region40
      $region39: #{tpu_custom_call.1} parent=35 // pred_region
        %s907 = smul.u32 15, %s20
      $region40: #{tpu_custom_call.1} parent=35 // pred_fallthru
        _
    $region36: #{tpu_custom_call.1} parent=5 // pred_fallthru
      _
    %p908 = scmp.le.s32.totalorder 2, %s10
    // Predicated region
    $region41: #{tpu_custom_call.1} parent=5 // pred_check
      %p909 = pneg %p908
    $region42: #{tpu_custom_call.1} parent=5 // pred_check_branch
      %911 = sbr.rel (%p909) target = $region44
    $region43: #{tpu_custom_call.1} parent=5 // pred_region
      %s912 = ssub.s32 %s10, 2
      // Predicated region
      $region45: #{tpu_custom_call.1} parent=43 // pred_check
        %p913 = pneg %p159
      $region46: #{tpu_custom_call.1} parent=43 // pred_check_branch
        %915 = sbr.rel (%p913) target = $region48
      $region47: #{tpu_custom_call.1} parent=43 // pred_region
        %s916 = smul.u32 15, %s22
        %p917 = scmp.lt.s32.totalorder %s21, 0
        %s918 = scalar_select %p917, %s21, 0
        %p919 = scmp.lt.s32.totalorder %s916, 59
        %s920 = scalar_select %p919, %s916, 59
        %s921 = smul.addr %s920, 7
        %s922 = smul.addr %s918, 420
        %s923 = sadd.s32 %s921, %s922
        %s924 = smul.addr %s923, 8
        %s925 = scalar_lea.vmem %s4, %s924
      $region48: #{tpu_custom_call.1} parent=43 // pred_fallthru
        _
    $region44: #{tpu_custom_call.1} parent=5 // pred_fallthru
      _
  $region6: #{tpu_custom_call.1} parent=0 // loop_footer
    %s14 = sadd.s32 1, %s10
  $region7: #{tpu_custom_call.1} parent=0 // loop_footer_branch
    %9 = sbr.rel target = $region3
  $region8: #{tpu_custom_call.1} parent=0 // loop_exit
    _

</llo_original>
